<compile_context>
chip_gen: v7x
topology: tpu7x:2x2x1
jax: 0.10.0
libtpu: 0.0.40
codegen_flags: <defaults>
</compile_context>

<pallas_src>
import functools

import jax
import jax.numpy as jnp
from jax import lax
from jax.experimental import pallas as pl
from jax.experimental.pallas import tpu as pltpu

LAMBDA_NOOBJ = 0.5
LAMBDA_COORD = 5.0
EPS = 1e-9
LANES = 128

# scalar-channel indices in the structure-of-arrays slab
(_P_OBJ, _P_X, _P_Y, _P_WL, _P_HL,
 _T_OBJ, _T_X, _T_Y, _T_W, _T_H, _T_CLS) = range(11)
_NCH = 11

# Per-channel padding values chosen so padded cells contribute exactly nothing:
#   preds -> 0 (sigmoid(0)=0.5, exp(0)=1), t_obj=-1 (neither obj nor noobj),
#   t_xy=0.5 / t_wh=1.0 (coord_sq == 0), class id 0 (CE is obj-masked anyway).
_PAD_VALS = (0.0, 0.0, 0.0, 0.0, 0.0, -1.0, 0.5, 0.5, 1.0, 1.0, 0.0)


def _yolo_loss_kernel(scal_ref, logits_ref, out_ref, *, class_exp_dtype):
    """scal_ref: (11, TR, 128) f32, logits_ref: (C, TR, 128), out_ref: (1, 8, 128)."""
    f32 = jnp.float32

    def ch(k):
        return scal_ref[k].astype(f32)                  # (TR, 128) lane-dense

    p0 = ch(_P_OBJ)
    px, py = ch(_P_X), ch(_P_Y)
    pwl, phl = ch(_P_WL), ch(_P_HL)                     # wh logit + log(anchor)
    t0 = ch(_T_OBJ)
    tx, ty, tw, th = ch(_T_X), ch(_T_Y), ch(_T_W), ch(_T_H)
    tcls = ch(_T_CLS)

    # Exact compare-based masks (t0 may legitimately be values other than 0/1,
    # e.g. -1 "ignore" and the padding sentinel; those cells hit neither mask).
    obj_f = jnp.where(t0 == 1.0, 1.0, 0.0)
    noobj_f = jnp.where(t0 == 0.0, 1.0, 0.0)

    # Objectness: one exp(-|p0|) shared between sigmoid(p0) and the stable BCE.
    e0 = jnp.exp(-jnp.abs(p0))
    inv0 = pl.reciprocal(1.0 + e0, approx=True)          # low-sensitivity path
    sig0 = jnp.where(p0 >= 0.0, inv0, e0 * inv0)
    # NOTE: e0 in (0, 1], so log(1+e0) differs from log1p(e0) by <= ~1 ulp(1.0),
    # far below the rounding of the dominant max(p0, 0) term -- log1p not needed.
    bce = jnp.maximum(p0, 0.0) - p0 * t0 + jnp.log(1.0 + e0)

    def stable_sigmoid_exact(x):
        # Feeds the lambda_coord * sum-MSE over ALL cells -> keep exact divide.
        e = jnp.exp(-jnp.abs(x))
        inv = 1.0 / (1.0 + e)
        return jnp.where(x >= 0.0, inv, e * inv)

    # Box predictions: cat(sigmoid(xy), anchors * exp(wh)).  The anchor
    # multiply is folded into the logit on the host: a*exp(p) == exp(p+log a).
    bx = stable_sigmoid_exact(px)
    by = stable_sigmoid_exact(py)
    bw = jnp.exp(pwl)
    bh = jnp.exp(phl)

    # Coord loss: MSE(reduction='sum') over ALL cells (matches the reference).
    coord_sq = ((bx - tx) ** 2 + (by - ty) ** 2
                + (bw - tw) ** 2 + (bh - th) ** 2)

    # Midpoint IoU; only enters the loss through the obj mask.
    p_x1, p_y1 = bx - 0.5 * bw, by - 0.5 * bh
    p_x2, p_y2 = bx + 0.5 * bw, by + 0.5 * bh
    t_x1, t_y1 = tx - 0.5 * tw, ty - 0.5 * th
    t_x2, t_y2 = tx + 0.5 * tw, ty + 0.5 * th
    iw = jnp.maximum(jnp.minimum(p_x2, t_x2) - jnp.maximum(p_x1, t_x1), 0.0)
    ih = jnp.maximum(jnp.minimum(p_y2, t_y2) - jnp.maximum(p_y1, t_y1), 0.0)
    inter = iw * ih
    union = bw * bh + jnp.abs(tw * th) - inter + EPS     # bw*bh > 0 already
    iou = inter * pl.reciprocal(union, approx=True)

    obj_sq = (sig0 - iou * t0) ** 2

    # Class cross-entropy on channel-major logits (C, TR, 128): lane-dense
    # exps; the class reduction is an elementwise reduce across C vreg slabs.
    lg = logits_ref[...].astype(f32)                     # (C, TR, 128)
    m = jnp.max(lg, axis=0)                              # (TR, 128)
    d = (lg - m[None]).astype(class_exp_dtype)
    z = jnp.exp(d).astype(f32)                           # bf16 exps on v6e/v7x if requested
    lse = m + jnp.log(jnp.sum(z, axis=0))
    cid = tcls.astype(jnp.int32)
    c_iota = lax.broadcasted_iota(jnp.int32, lg.shape, 0)
    true_logit = jnp.sum(jnp.where(c_iota == cid[None], lg, 0.0), axis=0)
    ce = lse - true_logit                                # (TR, 128)

    def rsum(x):
        return jnp.sum(x, axis=0, keepdims=True)         # (1, 128)

    # Assemble all partial-sum rows and write one unmasked (8, 128) store.
    rows = jnp.concatenate([
        rsum(LAMBDA_COORD * coord_sq + obj_f * obj_sq),   # row 0
        rsum(noobj_f * bce),                              # row 1
        rsum(noobj_f),                                    # row 2
        rsum(obj_f * ce),                                 # row 3
        rsum(obj_f),                                      # row 4
        jnp.zeros((3, LANES), f32),                       # pad to 8 sublanes
    ], axis=0)
    out_ref[0] = rows


def yolo_loss(preds, target, anchors, *, cells_per_block=32768,
              logits_dtype=jnp.bfloat16, class_exp_dtype=jnp.float32):
    """preds: (B, A, S, S, 5+C), target: (B, A, S, S, 6), anchors: (A, 2)."""
    B, A, S1, S2, D = preds.shape
    C = D - 5
    N = B * A * S1 * S2

    p = preds.reshape(N, D).astype(jnp.float32)
    t = target.reshape(N, 6).astype(jnp.float32)
    log_anc = jnp.broadcast_to(
        jnp.log(anchors.astype(jnp.float32)).reshape(1, A, 1, 1, 2),
        (B, A, S1, S2, 2)).reshape(N, 2)

    # Structure-of-arrays scalar channels (always f32), lane-dense: (11, N).
    scal = jnp.stack(
        [p[:, 0], p[:, 1], p[:, 2],
         p[:, 3] + log_anc[:, 0], p[:, 4] + log_anc[:, 1],
         t[:, 0], t[:, 1], t[:, 2], t[:, 3], t[:, 4], t[:, 5]], axis=0)
    # Class logits channel-major (C, N); stored narrow to cut HBM read traffic.
    logits = p[:, 5:].astype(logits_dtype).T

    # Tiling: rows of 128 lanes, TR rows per grid step (TR multiple of 16 so
    # both the f32 scalar slab and the bf16 logits slab are natively tiled).
    SUB = 16
    R = pl.cdiv(N, LANES)
    tr_max = max(SUB, (cells_per_block // LANES) // SUB * SUB)
    g0 = pl.cdiv(R, tr_max)
    if g0 > 1 and g0 % 2 == 1:
        g0 += 1                       # even grid count keeps both v7x TCs busy
    TR = min(tr_max, max(SUB, pl.cdiv(pl.cdiv(R, g0), SUB) * SUB))
    G = pl.cdiv(R, TR)
    Rp = G * TR
    Np = Rp * LANES

    if Np > N:
        pad_vals = jnp.asarray(_PAD_VALS, jnp.float32)[:, None]
        scal = jnp.concatenate(
            [scal, jnp.broadcast_to(pad_vals, (_NCH, Np - N))], axis=1)
        logits = jnp.concatenate(
            [logits, jnp.zeros((C, Np - N), logits_dtype)], axis=1)
    scal = scal.reshape(_NCH, Rp, LANES)
    logits = logits.reshape(C, Rp, LANES)

    lg_bytes = jnp.dtype(logits_dtype).itemsize
    cost = pl.CostEstimate(
        flops=int(N) * (6 * C + 80),
        transcendentals=int(N) * (C + 10),
        bytes_accessed=int(Np) * (_NCH * 4 + C * lg_bytes) + G * 8 * LANES * 4,
    )

    parts = pl.pallas_call(
        functools.partial(_yolo_loss_kernel, class_exp_dtype=class_exp_dtype),
        out_shape=jax.ShapeDtypeStruct((G, 8, LANES), jnp.float32),
        grid_spec=pltpu.PrefetchScalarGridSpec(
            num_scalar_prefetch=0,
            grid=(G,),
            in_specs=[
                pl.BlockSpec((_NCH, TR, LANES), lambda i: (0, i, 0)),
                pl.BlockSpec((C, TR, LANES), lambda i: (0, i, 0)),
            ],
            out_specs=pl.BlockSpec((1, 8, LANES), lambda i: (i, 0, 0)),
        ),
        compiler_params=pltpu.CompilerParams(
            dimension_semantics=("parallel",),
            vmem_limit_bytes=48 * 1024 * 1024,
            allow_input_fusion=[True, True],
        ),
        cost_estimate=cost,
    )(scal, logits)

    sums = jnp.sum(parts[:, :5, :], axis=(0, 2))          # (5,)
    # NOTE: matches the PyTorch reference exactly, including a possible 0/0
    # when a batch has no object cells or no background cells.
    return (sums[0]
            + sums[3] / sums[4]
            + LAMBDA_NOOBJ * sums[1] / sums[2])


def yolo_loss_ref(preds, target, anchors):
    """Pure-JAX reference mirroring the PyTorch forward."""
    C = preds.shape[-1] - 5
    objf = (target[..., 0] == 1).reshape(-1).astype(jnp.float32)
    noobjf = (target[..., 0] == 0).reshape(-1).astype(jnp.float32)
    anc = anchors.reshape(1, 3, 1, 1, 2)
    box_p = jnp.concatenate(
        [jax.nn.sigmoid(preds[..., 1:3]), anc * jnp.exp(preds[..., 3:5])], axis=-1)
    box_t = target[..., 1:5]
    coord_loss = jnp.sum((box_p - box_t) ** 2)

    bp = box_p.reshape(-1, 4)
    bt = box_t.reshape(-1, 4)
    p1 = bp[:, :2] - bp[:, 2:] * 0.5
    p2 = bp[:, :2] + bp[:, 2:] * 0.5
    t1 = bt[:, :2] - bt[:, 2:] * 0.5
    t2 = bt[:, :2] + bt[:, 2:] * 0.5
    wh = jnp.maximum(jnp.minimum(p2, t2) - jnp.maximum(p1, t1), 0.0)
    inter = wh[:, 0] * wh[:, 1]
    iou = inter / (jnp.abs(bp[:, 2] * bp[:, 3]) + jnp.abs(bt[:, 2] * bt[:, 3])
                   - inter + EPS)

    x0 = preds[..., 0].reshape(-1)
    t0 = target[..., 0].reshape(-1)
    object_loss = jnp.sum(objf * (jax.nn.sigmoid(x0) - iou * t0) ** 2)
    bce = jnp.maximum(x0, 0.0) - x0 * t0 + jnp.log1p(jnp.exp(-jnp.abs(x0)))
    no_obj_loss = jnp.sum(noobjf * bce) / jnp.sum(noobjf)
    logits = preds[..., 5:].reshape(-1, C)
    cls = target[..., 5].reshape(-1).astype(jnp.int32)
    lse = jax.scipy.special.logsumexp(logits, axis=-1)
    true_logit = jnp.take_along_axis(logits, cls[:, None], axis=-1)[:, 0]
    class_loss = jnp.sum(objf * (lse - true_logit)) / jnp.sum(objf)
    return (LAMBDA_COORD * coord_loss + object_loss + class_loss
            + LAMBDA_NOOBJ * no_obj_loss)


if __name__ == "__main__":
    B, A, S, C = 2, 3, 8, 20  # N = 2*3*8*8 = 384 cells, D = 25
    key = jax.random.PRNGKey(0)
    k1, k2, k3, k4, k5 = jax.random.split(key, 5)

    preds = 0.5 * jax.random.normal(k1, (B, A, S, S, 5 + C), jnp.float32)
    obj_mask = (jax.random.uniform(k2, (B, A, S, S)) < 0.3).astype(jnp.float32)
    boxes = jax.random.uniform(k3, (B, A, S, S, 4), minval=0.05, maxval=0.95)
    cls_id = jax.random.randint(k4, (B, A, S, S), 0, C).astype(jnp.float32)
    target = jnp.concatenate([obj_mask[..., None], boxes, cls_id[..., None]], axis=-1)
    anchors = jax.random.uniform(k5, (A, 2), minval=0.2, maxval=1.5)

    loss = jax.block_until_ready(yolo_loss(preds, target, anchors))
    ref = jax.block_until_ready(yolo_loss_ref(preds, target, anchors))

    assert jnp.isfinite(loss), f"non-finite loss: {loss}"
    assert jnp.allclose(loss, ref, rtol=2e-4, atol=2e-4), (loss, ref)
    print("KERNEL_OK")
</pallas_src>

<mosaic_0001>
module attributes {stable_mosaic.version = 11 : i64} {
  func.func @_yolo_loss_kernel(%arg0: i32, %arg1: memref<11x16x128xf32, #tpu.memory_space<vmem>>, %arg2: memref<20x16x128xbf16, #tpu.memory_space<vmem>>, %arg3: memref<1x8x128xf32, #tpu.memory_space<vmem>>) attributes {dimension_semantics = [#tpu.dimension_semantics<parallel>], iteration_bounds = array<i64: 1>, scalar_prefetch = 0 : i64, scratch_operands = 0 : i64, tpu.core_type = #tpu.core_type<tc>, window_params = [{transform_indices = @transform_0, window_bounds = array<i64: 11, 16, 128>}, {transform_indices = @transform_1, window_bounds = array<i64: 20, 16, 128>}, {transform_indices = @transform_2, window_bounds = array<i64: 1, 8, 128>}]} {
    %c0 = arith.constant 0 : index
    %c0_0 = arith.constant 0 : index
    %c0_1 = arith.constant 0 : index
    %0 = vector.load %arg1[%c0, %c0_0, %c0_1] : memref<11x16x128xf32, #tpu.memory_space<vmem>>, vector<1x16x128xf32>
    %1 = vector.shape_cast %0 : vector<1x16x128xf32> to vector<16x128xf32>
    %c1 = arith.constant 1 : index
    %c0_2 = arith.constant 0 : index
    %c0_3 = arith.constant 0 : index
    %2 = vector.load %arg1[%c1, %c0_2, %c0_3] : memref<11x16x128xf32, #tpu.memory_space<vmem>>, vector<1x16x128xf32>
    %3 = vector.shape_cast %2 : vector<1x16x128xf32> to vector<16x128xf32>
    %c2 = arith.constant 2 : index
    %c0_4 = arith.constant 0 : index
    %c0_5 = arith.constant 0 : index
    %4 = vector.load %arg1[%c2, %c0_4, %c0_5] : memref<11x16x128xf32, #tpu.memory_space<vmem>>, vector<1x16x128xf32>
    %5 = vector.shape_cast %4 : vector<1x16x128xf32> to vector<16x128xf32>
    %c3 = arith.constant 3 : index
    %c0_6 = arith.constant 0 : index
    %c0_7 = arith.constant 0 : index
    %6 = vector.load %arg1[%c3, %c0_6, %c0_7] : memref<11x16x128xf32, #tpu.memory_space<vmem>>, vector<1x16x128xf32>
    %7 = vector.shape_cast %6 : vector<1x16x128xf32> to vector<16x128xf32>
    %c4 = arith.constant 4 : index
    %c0_8 = arith.constant 0 : index
    %c0_9 = arith.constant 0 : index
    %8 = vector.load %arg1[%c4, %c0_8, %c0_9] : memref<11x16x128xf32, #tpu.memory_space<vmem>>, vector<1x16x128xf32>
    %9 = vector.shape_cast %8 : vector<1x16x128xf32> to vector<16x128xf32>
    %c5 = arith.constant 5 : index
    %c0_10 = arith.constant 0 : index
    %c0_11 = arith.constant 0 : index
    %10 = vector.load %arg1[%c5, %c0_10, %c0_11] : memref<11x16x128xf32, #tpu.memory_space<vmem>>, vector<1x16x128xf32>
    %11 = vector.shape_cast %10 : vector<1x16x128xf32> to vector<16x128xf32>
    %c6 = arith.constant 6 : index
    %c0_12 = arith.constant 0 : index
    %c0_13 = arith.constant 0 : index
    %12 = vector.load %arg1[%c6, %c0_12, %c0_13] : memref<11x16x128xf32, #tpu.memory_space<vmem>>, vector<1x16x128xf32>
    %13 = vector.shape_cast %12 : vector<1x16x128xf32> to vector<16x128xf32>
    %c7 = arith.constant 7 : index
    %c0_14 = arith.constant 0 : index
    %c0_15 = arith.constant 0 : index
    %14 = vector.load %arg1[%c7, %c0_14, %c0_15] : memref<11x16x128xf32, #tpu.memory_space<vmem>>, vector<1x16x128xf32>
    %15 = vector.shape_cast %14 : vector<1x16x128xf32> to vector<16x128xf32>
    %c8 = arith.constant 8 : index
    %c0_16 = arith.constant 0 : index
    %c0_17 = arith.constant 0 : index
    %16 = vector.load %arg1[%c8, %c0_16, %c0_17] : memref<11x16x128xf32, #tpu.memory_space<vmem>>, vector<1x16x128xf32>
    %17 = vector.shape_cast %16 : vector<1x16x128xf32> to vector<16x128xf32>
    %c9 = arith.constant 9 : index
    %c0_18 = arith.constant 0 : index
    %c0_19 = arith.constant 0 : index
    %18 = vector.load %arg1[%c9, %c0_18, %c0_19] : memref<11x16x128xf32, #tpu.memory_space<vmem>>, vector<1x16x128xf32>
    %19 = vector.shape_cast %18 : vector<1x16x128xf32> to vector<16x128xf32>
    %c10 = arith.constant 10 : index
    %c0_20 = arith.constant 0 : index
    %c0_21 = arith.constant 0 : index
    %20 = vector.load %arg1[%c10, %c0_20, %c0_21] : memref<11x16x128xf32, #tpu.memory_space<vmem>>, vector<1x16x128xf32>
    %21 = vector.shape_cast %20 : vector<1x16x128xf32> to vector<16x128xf32>
    %cst = arith.constant 1.000000e+00 : f32
    %22 = vector.broadcast %cst : f32 to vector<16x128xf32>
    %23 = arith.cmpf oeq, %11, %22 : vector<16x128xf32>
    %cst_22 = arith.constant 1.000000e+00 : f32
    %cst_23 = arith.constant 0.000000e+00 : f32
    %24 = vector.broadcast %cst_22 : f32 to vector<16x128xf32>
    %25 = vector.broadcast %cst_23 : f32 to vector<16x128xf32>
    %26 = arith.select %23, %24, %25 : vector<16x128xi1>, vector<16x128xf32>
    %cst_24 = arith.constant 0.000000e+00 : f32
    %27 = vector.broadcast %cst_24 : f32 to vector<16x128xf32>
    %28 = arith.cmpf oeq, %11, %27 : vector<16x128xf32>
    %cst_25 = arith.constant 1.000000e+00 : f32
    %cst_26 = arith.constant 0.000000e+00 : f32
    %29 = vector.broadcast %cst_25 : f32 to vector<16x128xf32>
    %30 = vector.broadcast %cst_26 : f32 to vector<16x128xf32>
    %31 = arith.select %28, %29, %30 : vector<16x128xi1>, vector<16x128xf32>
    %32 = math.absf %1 : vector<16x128xf32>
    %cst_27 = arith.constant 0.000000e+00 : f32
    %33 = vector.broadcast %cst_27 : f32 to vector<16x128xf32>
    %34 = arith.subf %33, %32 : vector<16x128xf32>
    %35 = math.exp %34 : vector<16x128xf32>
    %cst_28 = arith.constant 1.000000e+00 : f32
    %36 = vector.broadcast %cst_28 : f32 to vector<16x128xf32>
    %37 = arith.addf %36, %35 : vector<16x128xf32>
    %38 = tpu.reciprocal %37 {approx = true} : vector<16x128xf32> -> vector<16x128xf32>
    %cst_29 = arith.constant 0.000000e+00 : f32
    %39 = vector.broadcast %cst_29 : f32 to vector<16x128xf32>
    %40 = arith.cmpf oge, %1, %39 : vector<16x128xf32>
    %41 = arith.mulf %35, %38 : vector<16x128xf32>
    %42 = arith.select %40, %38, %41 : vector<16x128xi1>, vector<16x128xf32>
    %cst_30 = arith.constant 0.000000e+00 : f32
    %43 = vector.broadcast %cst_30 : f32 to vector<16x128xf32>
    %44 = arith.maximumf %1, %43 : vector<16x128xf32>
    %45 = arith.mulf %1, %11 : vector<16x128xf32>
    %46 = arith.subf %44, %45 : vector<16x128xf32>
    %cst_31 = arith.constant 1.000000e+00 : f32
    %47 = vector.broadcast %cst_31 : f32 to vector<16x128xf32>
    %48 = arith.addf %47, %35 : vector<16x128xf32>
    %49 = math.log %48 : vector<16x128xf32>
    %50 = arith.addf %46, %49 : vector<16x128xf32>
    %51 = math.absf %3 : vector<16x128xf32>
    %cst_32 = arith.constant 0.000000e+00 : f32
    %52 = vector.broadcast %cst_32 : f32 to vector<16x128xf32>
    %53 = arith.subf %52, %51 : vector<16x128xf32>
    %54 = math.exp %53 : vector<16x128xf32>
    %cst_33 = arith.constant 1.000000e+00 : f32
    %55 = vector.broadcast %cst_33 : f32 to vector<16x128xf32>
    %56 = arith.addf %55, %54 : vector<16x128xf32>
    %cst_34 = arith.constant 1.000000e+00 : f32
    %57 = vector.broadcast %cst_34 : f32 to vector<16x128xf32>
    %58 = arith.divf %57, %56 : vector<16x128xf32>
    %cst_35 = arith.constant 0.000000e+00 : f32
    %59 = vector.broadcast %cst_35 : f32 to vector<16x128xf32>
    %60 = arith.cmpf oge, %3, %59 : vector<16x128xf32>
    %61 = arith.mulf %54, %58 : vector<16x128xf32>
    %62 = arith.select %60, %58, %61 : vector<16x128xi1>, vector<16x128xf32>
    %63 = math.absf %5 : vector<16x128xf32>
    %cst_36 = arith.constant 0.000000e+00 : f32
    %64 = vector.broadcast %cst_36 : f32 to vector<16x128xf32>
    %65 = arith.subf %64, %63 : vector<16x128xf32>
    %66 = math.exp %65 : vector<16x128xf32>
    %cst_37 = arith.constant 1.000000e+00 : f32
    %67 = vector.broadcast %cst_37 : f32 to vector<16x128xf32>
    %68 = arith.addf %67, %66 : vector<16x128xf32>
    %cst_38 = arith.constant 1.000000e+00 : f32
    %69 = vector.broadcast %cst_38 : f32 to vector<16x128xf32>
    %70 = arith.divf %69, %68 : vector<16x128xf32>
    %cst_39 = arith.constant 0.000000e+00 : f32
    %71 = vector.broadcast %cst_39 : f32 to vector<16x128xf32>
    %72 = arith.cmpf oge, %5, %71 : vector<16x128xf32>
    %73 = arith.mulf %66, %70 : vector<16x128xf32>
    %74 = arith.select %72, %70, %73 : vector<16x128xi1>, vector<16x128xf32>
    %75 = math.exp %7 : vector<16x128xf32>
    %76 = math.exp %9 : vector<16x128xf32>
    %77 = arith.subf %62, %13 : vector<16x128xf32>
    %78 = arith.mulf %77, %77 : vector<16x128xf32>
    %79 = arith.subf %74, %15 : vector<16x128xf32>
    %80 = arith.mulf %79, %79 : vector<16x128xf32>
    %81 = arith.addf %78, %80 : vector<16x128xf32>
    %82 = arith.subf %75, %17 : vector<16x128xf32>
    %83 = arith.mulf %82, %82 : vector<16x128xf32>
    %84 = arith.addf %81, %83 : vector<16x128xf32>
    %85 = arith.subf %76, %19 : vector<16x128xf32>
    %86 = arith.mulf %85, %85 : vector<16x128xf32>
    %87 = arith.addf %84, %86 : vector<16x128xf32>
    %cst_40 = arith.constant 5.000000e-01 : f32
    %88 = vector.broadcast %cst_40 : f32 to vector<16x128xf32>
    %89 = arith.mulf %88, %75 : vector<16x128xf32>
    %90 = arith.subf %62, %89 : vector<16x128xf32>
    %cst_41 = arith.constant 5.000000e-01 : f32
    %91 = vector.broadcast %cst_41 : f32 to vector<16x128xf32>
    %92 = arith.mulf %91, %76 : vector<16x128xf32>
    %93 = arith.subf %74, %92 : vector<16x128xf32>
    %cst_42 = arith.constant 5.000000e-01 : f32
    %94 = vector.broadcast %cst_42 : f32 to vector<16x128xf32>
    %95 = arith.mulf %94, %75 : vector<16x128xf32>
    %96 = arith.addf %62, %95 : vector<16x128xf32>
    %cst_43 = arith.constant 5.000000e-01 : f32
    %97 = vector.broadcast %cst_43 : f32 to vector<16x128xf32>
    %98 = arith.mulf %97, %76 : vector<16x128xf32>
    %99 = arith.addf %74, %98 : vector<16x128xf32>
    %cst_44 = arith.constant 5.000000e-01 : f32
    %100 = vector.broadcast %cst_44 : f32 to vector<16x128xf32>
    %101 = arith.mulf %100, %17 : vector<16x128xf32>
    %102 = arith.subf %13, %101 : vector<16x128xf32>
    %cst_45 = arith.constant 5.000000e-01 : f32
    %103 = vector.broadcast %cst_45 : f32 to vector<16x128xf32>
    %104 = arith.mulf %103, %19 : vector<16x128xf32>
    %105 = arith.subf %15, %104 : vector<16x128xf32>
    %cst_46 = arith.constant 5.000000e-01 : f32
    %106 = vector.broadcast %cst_46 : f32 to vector<16x128xf32>
    %107 = arith.mulf %106, %17 : vector<16x128xf32>
    %108 = arith.addf %13, %107 : vector<16x128xf32>
    %cst_47 = arith.constant 5.000000e-01 : f32
    %109 = vector.broadcast %cst_47 : f32 to vector<16x128xf32>
    %110 = arith.mulf %109, %19 : vector<16x128xf32>
    %111 = arith.addf %15, %110 : vector<16x128xf32>
    %112 = arith.minimumf %96, %108 : vector<16x128xf32>
    %113 = arith.maximumf %90, %102 : vector<16x128xf32>
    %114 = arith.subf %112, %113 : vector<16x128xf32>
    %cst_48 = arith.constant 0.000000e+00 : f32
    %115 = vector.broadcast %cst_48 : f32 to vector<16x128xf32>
    %116 = arith.maximumf %114, %115 : vector<16x128xf32>
    %117 = arith.minimumf %99, %111 : vector<16x128xf32>
    %118 = arith.maximumf %93, %105 : vector<16x128xf32>
    %119 = arith.subf %117, %118 : vector<16x128xf32>
    %cst_49 = arith.constant 0.000000e+00 : f32
    %120 = vector.broadcast %cst_49 : f32 to vector<16x128xf32>
    %121 = arith.maximumf %119, %120 : vector<16x128xf32>
    %122 = arith.mulf %116, %121 : vector<16x128xf32>
    %123 = arith.mulf %75, %76 : vector<16x128xf32>
    %124 = arith.mulf %17, %19 : vector<16x128xf32>
    %125 = math.absf %124 : vector<16x128xf32>
    %126 = arith.addf %123, %125 : vector<16x128xf32>
    %127 = arith.subf %126, %122 : vector<16x128xf32>
    %cst_50 = arith.constant 9.99999971E-10 : f32
    %128 = vector.broadcast %cst_50 : f32 to vector<16x128xf32>
    %129 = arith.addf %127, %128 : vector<16x128xf32>
    %130 = tpu.reciprocal %129 {approx = true} : vector<16x128xf32> -> vector<16x128xf32>
    %131 = arith.mulf %122, %130 : vector<16x128xf32>
    %132 = arith.mulf %131, %11 : vector<16x128xf32>
    %133 = arith.subf %42, %132 : vector<16x128xf32>
    %134 = arith.mulf %133, %133 : vector<16x128xf32>
    %c0_51 = arith.constant 0 : index
    %c0_52 = arith.constant 0 : index
    %c0_53 = arith.constant 0 : index
    %135 = vector.load %arg2[%c0_51, %c0_52, %c0_53] : memref<20x16x128xbf16, #tpu.memory_space<vmem>>, vector<20x16x128xbf16>
    %136 = arith.extf %135 : vector<20x16x128xbf16> to vector<20x16x128xf32>
    %cst_54 = arith.constant dense<0xFF800000> : vector<16x128xf32>
    %137 = vector.multi_reduction <maximumf>, %136, %cst_54 [0] : vector<20x16x128xf32> to vector<16x128xf32>
    %138 = vector.shape_cast %137 : vector<16x128xf32> to vector<1x16x128xf32>
    %139 = vector.broadcast %138 : vector<1x16x128xf32> to vector<20x16x128xf32>
    %140 = arith.subf %136, %139 : vector<20x16x128xf32>
    %141 = math.exp %140 : vector<20x16x128xf32>
    %cst_55 = arith.constant dense<0.000000e+00> : vector<16x128xf32>
    %142 = vector.multi_reduction <add>, %141, %cst_55 [0] : vector<20x16x128xf32> to vector<16x128xf32>
    %143 = math.log %142 : vector<16x128xf32>
    %144 = arith.addf %137, %143 : vector<16x128xf32>
    %145 = arith.fptosi %21 : vector<16x128xf32> to vector<16x128xi32>
    %146 = tpu.iota {dimensions = array<i32: 0>} : vector<20x16x128xi32>
    %147 = vector.shape_cast %145 : vector<16x128xi32> to vector<1x16x128xi32>
    %148 = vector.broadcast %147 : vector<1x16x128xi32> to vector<20x16x128xi32>
    %149 = arith.cmpi eq, %146, %148 : vector<20x16x128xi32>
    %cst_56 = arith.constant 0.000000e+00 : f32
    %150 = vector.broadcast %cst_56 : f32 to vector<20x16x128xf32>
    %151 = arith.select %149, %136, %150 : vector<20x16x128xi1>, vector<20x16x128xf32>
    %cst_57 = arith.constant dense<0.000000e+00> : vector<16x128xf32>
    %152 = vector.multi_reduction <add>, %151, %cst_57 [0] : vector<20x16x128xf32> to vector<16x128xf32>
    %153 = arith.subf %144, %152 : vector<16x128xf32>
    %cst_58 = arith.constant 5.000000e+00 : f32
    %154 = vector.broadcast %cst_58 : f32 to vector<16x128xf32>
    %155 = arith.mulf %154, %87 : vector<16x128xf32>
    %156 = arith.mulf %26, %134 : vector<16x128xf32>
    %157 = arith.addf %155, %156 : vector<16x128xf32>
    %cst_59 = arith.constant dense<0.000000e+00> : vector<128xf32>
    %158 = vector.multi_reduction <add>, %157, %cst_59 [0] : vector<16x128xf32> to vector<128xf32>
    %159 = vector.shape_cast %158 : vector<128xf32> to vector<1x128xf32>
    %160 = arith.mulf %31, %50 : vector<16x128xf32>
    %cst_60 = arith.constant dense<0.000000e+00> : vector<128xf32>
    %161 = vector.multi_reduction <add>, %160, %cst_60 [0] : vector<16x128xf32> to vector<128xf32>
    %162 = vector.shape_cast %161 : vector<128xf32> to vector<1x128xf32>
    %cst_61 = arith.constant dense<0.000000e+00> : vector<128xf32>
    %163 = vector.multi_reduction <add>, %31, %cst_61 [0] : vector<16x128xf32> to vector<128xf32>
    %164 = vector.shape_cast %163 : vector<128xf32> to vector<1x128xf32>
    %165 = arith.mulf %26, %153 : vector<16x128xf32>
    %cst_62 = arith.constant dense<0.000000e+00> : vector<128xf32>
    %166 = vector.multi_reduction <add>, %165, %cst_62 [0] : vector<16x128xf32> to vector<128xf32>
    %167 = vector.shape_cast %166 : vector<128xf32> to vector<1x128xf32>
    %cst_63 = arith.constant dense<0.000000e+00> : vector<128xf32>
    %168 = vector.multi_reduction <add>, %26, %cst_63 [0] : vector<16x128xf32> to vector<128xf32>
    %169 = vector.shape_cast %168 : vector<128xf32> to vector<1x128xf32>
    %cst_64 = arith.constant 0.000000e+00 : f32
    %170 = vector.broadcast %cst_64 : f32 to vector<3x128xf32>
    %171 = tpu.concatenate %159, %162, %164, %167, %169, %170 in 0 : vector<1x128xf32>, vector<1x128xf32>, vector<1x128xf32>, vector<1x128xf32>, vector<1x128xf32>, vector<3x128xf32> -> vector<8x128xf32>
    %c0_65 = arith.constant 0 : index
    %c0_66 = arith.constant 0 : index
    %c0_67 = arith.constant 0 : index
    %172 = vector.load %arg3[%c0_65, %c0_66, %c0_67] : memref<1x8x128xf32, #tpu.memory_space<vmem>>, vector<1x8x128xf32>
    %173 = vector.shape_cast %172 : vector<1x8x128xf32> to vector<8x128xf32>
    %174 = vector.shape_cast %171 : vector<8x128xf32> to vector<1x8x128xf32>
    tpu.vector_store %arg3[%c0_65, %c0_66, %c0_67], %174 {strides = array<i32>} : memref<1x8x128xf32, #tpu.memory_space<vmem>>, vector<1x8x128xf32>,
    return
  }
  func.func @transform_0(%arg0: i32) -> (i32, i32, i32) {
    %c0_i32 = arith.constant 0 : i32
    %c0_i32_0 = arith.constant 0 : i32
    %c0_i32_1 = arith.constant 0 : i32
    return %c0_i32, %arg0, %c0_i32_0 : i32, i32, i32
  }
  func.func @transform_1(%arg0: i32) -> (i32, i32, i32) {
    %c0_i32 = arith.constant 0 : i32
    %c0_i32_0 = arith.constant 0 : i32
    %c0_i32_1 = arith.constant 0 : i32
    return %c0_i32, %arg0, %c0_i32_0 : i32, i32, i32
  }
  func.func @transform_2(%arg0: i32) -> (i32, i32, i32) {
    %c0_i32 = arith.constant 0 : i32
    %c0_i32_0 = arith.constant 0 : i32
    %c0_i32_1 = arith.constant 0 : i32
    return %arg0, %c0_i32, %c0_i32_0 : i32, i32, i32
  }
}

</mosaic_0001>

<llo_original>
// kernel: tpu_custom_call.1
$region0: #{tpu_custom_call.1}
  #allocation0 [shape = 'u32[]', space=smem, size = 0x4, offset = 0x4, fixed_abs, tag = 'smem constant byte address 0x4 - core index']
  #allocation1 [shape = 'u32[144,128]{1,0:T(1,128)}', space=vmem, size = 0x12000, scoped, tag = 'internal scratch']
  %s0 = inlined_call_operand.hbm [shape: f32[11,16,128], index: 0, kind: input, shape index: {}]
  %s1 = inlined_call_operand.hbm [shape: bf16[20,16,128], index: 1, kind: input, shape index: {}]
  %s2 = inlined_call_operand.hbm [shape: f32[1,8,128], index: 2, kind: output, shape index: {}]
  %s3 = sld [smem:[#allocation0]]
  $region26: #{tpu_custom_call.1} parent=0
    _
  %s5 = ssub.s32 1, %s3
  %s6 = scalar_select 0, %s5, %s3
  $region1: #{tpu_custom_call.1} parent=0
    #allocation2 [shape = 'u8[90112]{0}', space=vmem, size = 0x16000, scoped, tag = 'input window, operand 0, single buffered']
    #allocation3 [shape = 's32[1]{0}', space=sflag, size = 0x4, scoped, tag = 'scoped memory for tpu_custom_call.1']
    #allocation4 [shape = 's32[1]{0}', space=sflag, size = 0x4, scoped, tag = 'scoped memory for tpu_custom_call.1']
    #allocation5 [shape = 'u8[81920]{0}', space=vmem, size = 0x14000, scoped, tag = 'input window, operand 1, single buffered']
    #allocation6 [shape = 's32[1]{0}', space=sflag, size = 0x4, scoped, tag = 'scoped memory for tpu_custom_call.1']
    #allocation7 [shape = 'u8[4096]{0}', space=vmem, size = 0x1000, scoped, tag = 'output window, operand 0, single buffered']
    %7 = vsyncpa [#allocation3], 0
    %8 = vsyncpa [#allocation6], 0
    %9 = vsyncpa [#allocation4], 0
    // Predicated region
    $region2: #{tpu_custom_call.1} parent=1 // pred_check
      _
    $region3: #{tpu_custom_call.1} parent=1 // pred_check_branch
      %11 = sbr.rel (0) target = $region5
    $region4: #{tpu_custom_call.1} parent=1 // pred_region
      %s13 = ssub.s32 2816, 2816
      %14 = vsyncadd [#allocation3], %s13
      %s15 = sshll.u32 [#allocation2], 4
      %s16 = int_to_ptr.vmem [resolvable:$true] %s15
      %21 = dma.hbm_to_vmem [thread:$0]  %s0, 2816, %s16, [#allocation3], 128, 128, 8
    $region5: #{tpu_custom_call.1} parent=1 // pred_fallthru
      _
    // Predicated region
    $region6: #{tpu_custom_call.1} parent=1 // pred_check
      _
    $region7: #{tpu_custom_call.1} parent=1 // pred_check_branch
      %23 = sbr.rel (0) target = $region9
    $region8: #{tpu_custom_call.1} parent=1 // pred_region
      %s25 = ssub.s32 2560, 2560
      %26 = vsyncadd [#allocation6], %s25
      %s27 = sshll.u32 [#allocation5], 4
      %s28 = int_to_ptr.vmem [resolvable:$true] %s27
      %33 = dma.hbm_to_vmem [thread:$0]  %s1, 2560, %s28, [#allocation6], 64, 64, 4
    $region9: #{tpu_custom_call.1} parent=1 // pred_fallthru
      _
    // Predicated region
    $region10: #{tpu_custom_call.1} parent=1 // pred_check
      _
    $region11: #{tpu_custom_call.1} parent=1 // pred_check_branch
      %35 = sbr.rel (0) target = $region13
    $region12: #{tpu_custom_call.1} parent=1 // pred_region
      %36 = dma.done [#allocation3], 2816
    $region13: #{tpu_custom_call.1} parent=1 // pred_fallthru
      _
    // Predicated region
    $region14: #{tpu_custom_call.1} parent=1 // pred_check
      _
    $region15: #{tpu_custom_call.1} parent=1 // pred_check_branch
      %38 = sbr.rel (0) target = $region17
    $region16: #{tpu_custom_call.1} parent=1 // pred_region
      %39 = dma.done [#allocation6], 2560
    $region17: #{tpu_custom_call.1} parent=1 // pred_fallthru
      _
    %v40 = vld [vmem:[#allocation2] sm:$0xff]
    %v41 = vld [vmem:[#allocation2 + $0x8] sm:$0xff]
    %s42 = scalar_lea.vmem [#allocation2], 16
    %v43 = vld [vmem:[%s42] sm:$0xff]
    %v44 = vld [vmem:[%s42 + $0x8] sm:$0xff]
    %s45 = scalar_lea.vmem [#allocation2], 32
    %v46 = vld [vmem:[%s45] sm:$0xff]
    %v47 = vld [vmem:[%s45 + $0x8] sm:$0xff]
    %s48 = scalar_lea.vmem [#allocation2], 48
    %v49 = vld [vmem:[%s48] sm:$0xff]
    %v50 = vld [vmem:[%s48 + $0x8] sm:$0xff]
    %s51 = scalar_lea.vmem [#allocation2], 64
    %v52 = vld [vmem:[%s51] sm:$0xff]
    %v53 = vld [vmem:[%s51 + $0x8] sm:$0xff]
    %s54 = scalar_lea.vmem [#allocation2], 80
    %v55 = vld [vmem:[%s54] sm:$0xff]
    %v56 = vld [vmem:[%s54 + $0x8] sm:$0xff]
    %s57 = scalar_lea.vmem [#allocation2], 96
    %v58 = vld [vmem:[%s57] sm:$0xff]
    %v59 = vld [vmem:[%s57 + $0x8] sm:$0xff]
    %s60 = scalar_lea.vmem [#allocation2], 112
    %v61 = vld [vmem:[%s60] sm:$0xff]
    %v62 = vld [vmem:[%s60 + $0x8] sm:$0xff]
    %s63 = scalar_lea.vmem [#allocation2], 128
    %v64 = vld [vmem:[%s63] sm:$0xff]
    %v65 = vld [vmem:[%s63 + $0x8] sm:$0xff]
    %s66 = scalar_lea.vmem [#allocation2], 144
    %v67 = vld [vmem:[%s66] sm:$0xff]
    %v68 = vld [vmem:[%s66 + $0x8] sm:$0xff]
    %s69 = scalar_lea.vmem [#allocation2], 160
    %v70 = vld [vmem:[%s69] sm:$0xff]
    %v71 = vld [vmem:[%s69 + $0x8] sm:$0xff]
    %vm72 = vcmp.eq.f32.partialorder %v55, 1.0
    %vm73 = vcmp.eq.f32.partialorder %v56, 1.0
    %v74 = vsel %vm72, 1.0, 0.0
    %v75 = vsel %vm73, 1.0, 0.0
    %vm76 = vcmp.eq.f32.partialorder %v55, 0.0
    %vm77 = vcmp.eq.f32.partialorder %v56, 0.0
    %v78 = vsel %vm76, 1.0, 0.0
    %v79 = vsel %vm77, 1.0, 0.0
    %v80 = vand.u32 2147483647, %v40
    %v81 = vand.u32 2147483647, %v41
    %v82 = vsub.f32 0.0, %v80
    %v83 = vsub.f32 0.0, %v81
    %v84 = vmul.f32 %v82, 1.442695
    %v85 = vpow.pop %v84
    %v86 = vmul.f32 %v83, 1.442695
    %v87 = vpow.pop %v86
    %v88 = vadd.f32 %v85, 1.0
    %v89 = vadd.f32 %v87, 1.0
    %v90 = vrcp.pop %v88
    %v91 = vrcp.pop %v89
    %vm92 = vcmp.ge.f32.partialorder %v40, 0.0
    %vm93 = vcmp.ge.f32.partialorder %v41, 0.0
    %v94 = vmul.f32 %v85, %v90
    %v95 = vmul.f32 %v87, %v91
    %v96 = vsel %vm92, %v90, %v94
    %v97 = vsel %vm93, %v91, %v95
    %v98 = vmax.f32 %v40, 0.0
    %v99 = vmax.f32 %v41, 0.0
    %v100 = vmul.f32 %v40, %v55
    %v101 = vmul.f32 %v41, %v56
    %v102 = vsub.f32 %v98, %v100
    %v103 = vsub.f32 %v99, %v101
    %v104 = vlog2.pop %v88
    %v105 = vmul.f32 %v104, 0.6931472
    %v106 = vlog2.pop %v89
    %v107 = vmul.f32 %v106, 0.6931472
    %v108 = vadd.f32 %v102, %v105
    %v109 = vadd.f32 %v103, %v107
    %v110 = vand.u32 2147483647, %v43
    %v111 = vand.u32 2147483647, %v44
    %v112 = vsub.f32 0.0, %v110
    %v113 = vsub.f32 0.0, %v111
    %v114 = vmul.f32 %v112, 1.442695
    %v115 = vpow.pop %v114
    %v116 = vmul.f32 %v113, 1.442695
    %v117 = vpow.pop %v116
    %v118 = vadd.f32 %v115, 1.0
    %v119 = vadd.f32 %v117, 1.0
    %v120 = vrcp.pop %v118
    %v121 = vmul.f32 1.0, %v120
    %v122 = vrcp.pop %v119
    %v123 = vmul.f32 1.0, %v122
    %vm124 = vcmp.ge.f32.partialorder %v43, 0.0
    %vm125 = vcmp.ge.f32.partialorder %v44, 0.0
    %v126 = vmul.f32 %v115, %v121
    %v127 = vmul.f32 %v117, %v123
    %v128 = vsel %vm124, %v121, %v126
    %v129 = vsel %vm125, %v123, %v127
    %v130 = vand.u32 2147483647, %v46
    %v131 = vand.u32 2147483647, %v47
    %v132 = vsub.f32 0.0, %v130
    %v133 = vsub.f32 0.0, %v131
    %v134 = vmul.f32 %v132, 1.442695
    %v135 = vpow.pop %v134
    %v136 = vmul.f32 %v133, 1.442695
    %v137 = vpow.pop %v136
    %v138 = vadd.f32 %v135, 1.0
    %v139 = vadd.f32 %v137, 1.0
    %v140 = vrcp.pop %v138
    %v141 = vmul.f32 1.0, %v140
    %v142 = vrcp.pop %v139
    %v143 = vmul.f32 1.0, %v142
    %vm144 = vcmp.ge.f32.partialorder %v46, 0.0
    %vm145 = vcmp.ge.f32.partialorder %v47, 0.0
    %v146 = vmul.f32 %v135, %v141
    %v147 = vmul.f32 %v137, %v143
    %v148 = vsel %vm144, %v141, %v146
    %v149 = vsel %vm145, %v143, %v147
    %v150 = vmul.f32 %v49, 1.442695
    %v151 = vpow.pop %v150
    %v152 = vmul.f32 %v50, 1.442695
    %v153 = vpow.pop %v152
    %v154 = vmul.f32 %v52, 1.442695
    %v155 = vpow.pop %v154
    %v156 = vmul.f32 %v53, 1.442695
    %v157 = vpow.pop %v156
    %v158 = vsub.f32 %v128, %v58
    %v159 = vsub.f32 %v129, %v59
    %v160 = vmul.f32 %v158, %v158
    %v161 = vmul.f32 %v159, %v159
    %v162 = vsub.f32 %v148, %v61
    %v163 = vsub.f32 %v149, %v62
    %v164 = vmul.f32 %v162, %v162
    %v165 = vmul.f32 %v163, %v163
    %v166 = vadd.f32 %v160, %v164
    %v167 = vadd.f32 %v161, %v165
    %v168 = vsub.f32 %v151, %v64
    %v169 = vsub.f32 %v153, %v65
    %v170 = vmul.f32 %v168, %v168
    %v171 = vmul.f32 %v169, %v169
    %v172 = vadd.f32 %v166, %v170
    %v173 = vadd.f32 %v167, %v171
    %v174 = vsub.f32 %v155, %v67
    %v175 = vsub.f32 %v157, %v68
    %v176 = vmul.f32 %v174, %v174
    %v177 = vmul.f32 %v175, %v175
    %v178 = vadd.f32 %v172, %v176
    %v179 = vadd.f32 %v173, %v177
    %v180 = vmul.f32 %v151, 0.5
    %v181 = vmul.f32 %v153, 0.5
    %v182 = vsub.f32 %v128, %v180
    %v183 = vsub.f32 %v129, %v181
    %v184 = vmul.f32 %v155, 0.5
    %v185 = vmul.f32 %v157, 0.5
    %v186 = vsub.f32 %v148, %v184
    %v187 = vsub.f32 %v149, %v185
    %v188 = vadd.f32 %v128, %v180
    %v189 = vadd.f32 %v129, %v181
    %v190 = vadd.f32 %v148, %v184
    %v191 = vadd.f32 %v149, %v185
    %v192 = vmul.f32 %v64, 0.5
    %v193 = vmul.f32 %v65, 0.5
    %v194 = vsub.f32 %v58, %v192
    %v195 = vsub.f32 %v59, %v193
    %v196 = vmul.f32 %v67, 0.5
    %v197 = vmul.f32 %v68, 0.5
    %v198 = vsub.f32 %v61, %v196
    %v199 = vsub.f32 %v62, %v197
    %v200 = vadd.f32 %v58, %v192
    %v201 = vadd.f32 %v59, %v193
    %v202 = vadd.f32 %v61, %v196
    %v203 = vadd.f32 %v62, %v197
    %v204 = vmin.f32 %v188, %v200
    %v205 = vmin.f32 %v189, %v201
    %v206 = vmax.f32 %v182, %v194
    %v207 = vmax.f32 %v183, %v195
    %v208 = vsub.f32 %v204, %v206
    %v209 = vsub.f32 %v205, %v207
    %v210 = vmax.f32 %v208, 0.0
    %v211 = vmax.f32 %v209, 0.0
    %v212 = vmin.f32 %v190, %v202
    %v213 = vmin.f32 %v191, %v203
    %v214 = vmax.f32 %v186, %v198
    %v215 = vmax.f32 %v187, %v199
    %v216 = vsub.f32 %v212, %v214
    %v217 = vsub.f32 %v213, %v215
    %v218 = vmax.f32 %v216, 0.0
    %v219 = vmax.f32 %v217, 0.0
    %v220 = vmul.f32 %v210, %v218
    %v221 = vmul.f32 %v211, %v219
    %v222 = vmul.f32 %v151, %v155
    %v223 = vmul.f32 %v153, %v157
    %v224 = vmul.f32 %v64, %v67
    %v225 = vmul.f32 %v65, %v68
    %v226 = vand.u32 2147483647, %v224
    %v227 = vand.u32 2147483647, %v225
    %v228 = vadd.f32 %v222, %v226
    %v229 = vadd.f32 %v223, %v227
    %v230 = vsub.f32 %v228, %v220
    %v231 = vsub.f32 %v229, %v221
    %v232 = vadd.f32 %v230, 1e-09
    %v233 = vadd.f32 %v231, 1e-09
    %v234 = vrcp.pop %v232
    %v235 = vrcp.pop %v233
    %v236 = vmul.f32 %v220, %v234
    %v237 = vmul.f32 %v221, %v235
    %v238 = vmul.f32 %v236, %v55
    %v239 = vmul.f32 %v237, %v56
    %v240 = vsub.f32 %v96, %v238
    %v241 = vsub.f32 %v97, %v239
    %v242 = vmul.f32 %v240, %v240
    %v243 = vmul.f32 %v241, %v241
    %v244 = vld [vmem:[#allocation5] sm:$0xf]
    %v245 = vld [vmem:[#allocation5 + $0x4] sm:$0xf]
    %v246 = vld [vmem:[#allocation5 + $0x8] sm:$0xf]
    %v247 = vld [vmem:[#allocation5 + $0xc] sm:$0xf]
    %v248 = vld [vmem:[#allocation5 + $0x10] sm:$0xf]
    %v249 = vld [vmem:[#allocation5 + $0x14] sm:$0xf]
    %v250 = vld [vmem:[#allocation5 + $0x18] sm:$0xf]
    %v251 = vld [vmem:[#allocation5 + $0x1c] sm:$0xf]
    %v252 = vld [vmem:[#allocation5 + $0x20] sm:$0xf]
    %v253 = vld [vmem:[#allocation5 + $0x24] sm:$0xf]
    %v254 = vld [vmem:[#allocation5 + $0x28] sm:$0xf]
    %v255 = vld [vmem:[#allocation5 + $0x2c] sm:$0xf]
    %v256 = vld [vmem:[#allocation5 + $0x30] sm:$0xf]
    %v257 = vld [vmem:[#allocation5 + $0x34] sm:$0xf]
    %v258 = vld [vmem:[#allocation5 + $0x38] sm:$0xf]
    %v259 = vld [vmem:[#allocation5 + $0x3c] sm:$0xf]
    %v260 = vld [vmem:[#allocation5 + $0x40] sm:$0xf]
    %v261 = vld [vmem:[#allocation5 + $0x44] sm:$0xf]
    %v262 = vld [vmem:[#allocation5 + $0x48] sm:$0xf]
    %v263 = vld [vmem:[#allocation5 + $0x4c] sm:$0xf]
    %v264 = vld [vmem:[#allocation5 + $0x50] sm:$0xf]
    %v265 = vld [vmem:[#allocation5 + $0x54] sm:$0xf]
    %v266 = vld [vmem:[#allocation5 + $0x58] sm:$0xf]
    %v267 = vld [vmem:[#allocation5 + $0x5c] sm:$0xf]
    %v268 = vld [vmem:[#allocation5 + $0x60] sm:$0xf]
    %v269 = vld [vmem:[#allocation5 + $0x64] sm:$0xf]
    %v270 = vld [vmem:[#allocation5 + $0x68] sm:$0xf]
    %v271 = vld [vmem:[#allocation5 + $0x6c] sm:$0xf]
    %v272 = vld [vmem:[#allocation5 + $0x70] sm:$0xf]
    %v273 = vld [vmem:[#allocation5 + $0x74] sm:$0xf]
    %v274 = vld [vmem:[#allocation5 + $0x78] sm:$0xf]
    %v275 = vld [vmem:[#allocation5 + $0x7c] sm:$0xf]
    %v276 = vld [vmem:[#allocation5 + $0x80] sm:$0xf]
    %v277 = vld [vmem:[#allocation5 + $0x84] sm:$0xf]
    %v278 = vld [vmem:[#allocation5 + $0x88] sm:$0xf]
    %v279 = vld [vmem:[#allocation5 + $0x8c] sm:$0xf]
    %v280 = vld [vmem:[#allocation5 + $0x90] sm:$0xf]
    %v281 = vld [vmem:[#allocation5 + $0x94] sm:$0xf]
    %v282 = vld [vmem:[#allocation5 + $0x98] sm:$0xf]
    %v283 = vld [vmem:[#allocation5 + $0x9c] sm:$0xf]
    %v284 = vunpack.c.l.bf16 %v244
    %v285 = vunpack.c.l.bf16 %v245
    %v286 = vunpack.c.l.bf16 %v246
    %v287 = vunpack.c.l.bf16 %v247
    %v288 = vunpack.c.l.bf16 %v248
    %v289 = vunpack.c.l.bf16 %v249
    %v290 = vunpack.c.l.bf16 %v250
    %v291 = vunpack.c.l.bf16 %v251
    %v292 = vunpack.c.l.bf16 %v252
    %v293 = vunpack.c.l.bf16 %v253
    %v294 = vunpack.c.l.bf16 %v254
    %v295 = vunpack.c.l.bf16 %v255
    %v296 = vunpack.c.l.bf16 %v256
    %v297 = vunpack.c.l.bf16 %v257
    %v298 = vunpack.c.l.bf16 %v258
    %v299 = vunpack.c.l.bf16 %v259
    %v300 = vunpack.c.l.bf16 %v260
    %v301 = vunpack.c.l.bf16 %v261
    %v302 = vunpack.c.l.bf16 %v262
    %v303 = vunpack.c.l.bf16 %v263
    %v304 = vunpack.c.l.bf16 %v264
    %v305 = vunpack.c.l.bf16 %v265
    %v306 = vunpack.c.l.bf16 %v266
    %v307 = vunpack.c.l.bf16 %v267
    %v308 = vunpack.c.l.bf16 %v268
    %v309 = vunpack.c.l.bf16 %v269
    %v310 = vunpack.c.l.bf16 %v270
    %v311 = vunpack.c.l.bf16 %v271
    %v312 = vunpack.c.l.bf16 %v272
    %v313 = vunpack.c.l.bf16 %v273
    %v314 = vunpack.c.l.bf16 %v274
    %v315 = vunpack.c.l.bf16 %v275
    %v316 = vunpack.c.l.bf16 %v276
    %v317 = vunpack.c.l.bf16 %v277
    %v318 = vunpack.c.l.bf16 %v278
    %v319 = vunpack.c.l.bf16 %v279
    %v320 = vunpack.c.l.bf16 %v280
    %v321 = vunpack.c.l.bf16 %v281
    %v322 = vunpack.c.l.bf16 %v282
    %v323 = vunpack.c.l.bf16 %v283
    %v324 = vmax.f32 %v284, %v288
    %v325 = vmax.f32 %v286, %v290
    %v326 = vmax.f32 %v324, %v292
    %v327 = vmax.f32 %v325, %v294
    %v328 = vmax.f32 %v326, %v296
    %v329 = vmax.f32 %v327, %v298
    %v330 = vmax.f32 %v328, %v300
    %v331 = vmax.f32 %v329, %v302
    %v332 = vmax.f32 %v330, %v304
    %v333 = vmax.f32 %v331, %v306
    %v334 = vmax.f32 %v332, %v308
    %v335 = vmax.f32 %v333, %v310
    %v336 = vmax.f32 %v334, %v312
    %v337 = vmax.f32 %v335, %v314
    %v338 = vmax.f32 %v336, %v316
    %v339 = vmax.f32 %v337, %v318
    %v340 = vmax.f32 %v338, %v320
    %v341 = vmax.f32 %v339, %v322
    %v342 = vmax.f32 %v340, %v341
    %v343 = vmax.f32 %v285, %v289
    %v344 = vmax.f32 %v287, %v291
    %v345 = vmax.f32 %v343, %v293
    %v346 = vmax.f32 %v344, %v295
    %v347 = vmax.f32 %v345, %v297
    %v348 = vmax.f32 %v346, %v299
    %v349 = vmax.f32 %v347, %v301
    %v350 = vmax.f32 %v348, %v303
    %v351 = vmax.f32 %v349, %v305
    %v352 = vmax.f32 %v350, %v307
    %v353 = vmax.f32 %v351, %v309
    %v354 = vmax.f32 %v352, %v311
    %v355 = vmax.f32 %v353, %v313
    %v356 = vmax.f32 %v354, %v315
    %v357 = vmax.f32 %v355, %v317
    %v358 = vmax.f32 %v356, %v319
    %v359 = vmax.f32 %v357, %v321
    %v360 = vmax.f32 %v358, %v323
    %v361 = vmax.f32 %v359, %v360
    %v362 = vsub.f32 %v284, %v342
    %v363 = vsub.f32 %v285, %v361
    %v364 = vsub.f32 %v286, %v342
    %v365 = vsub.f32 %v287, %v361
    %v366 = vsub.f32 %v288, %v342
    %v367 = vsub.f32 %v289, %v361
    %v368 = vsub.f32 %v290, %v342
    %v369 = vsub.f32 %v291, %v361
    %v370 = vsub.f32 %v292, %v342
    %v371 = vsub.f32 %v293, %v361
    %v372 = vsub.f32 %v294, %v342
    %v373 = vsub.f32 %v295, %v361
    %v374 = vsub.f32 %v296, %v342
    %v375 = vsub.f32 %v297, %v361
    %v376 = vsub.f32 %v298, %v342
    %v377 = vsub.f32 %v299, %v361
    %v378 = vsub.f32 %v300, %v342
    %v379 = vsub.f32 %v301, %v361
    %v380 = vsub.f32 %v302, %v342
    %v381 = vsub.f32 %v303, %v361
    %v382 = vsub.f32 %v304, %v342
    %v383 = vsub.f32 %v305, %v361
    %v384 = vsub.f32 %v306, %v342
    %v385 = vsub.f32 %v307, %v361
    %v386 = vsub.f32 %v308, %v342
    %v387 = vsub.f32 %v309, %v361
    %v388 = vsub.f32 %v310, %v342
    %v389 = vsub.f32 %v311, %v361
    %v390 = vsub.f32 %v312, %v342
    %v391 = vsub.f32 %v313, %v361
    %v392 = vsub.f32 %v314, %v342
    %v393 = vsub.f32 %v315, %v361
    %v394 = vsub.f32 %v316, %v342
    %v395 = vsub.f32 %v317, %v361
    %v396 = vsub.f32 %v318, %v342
    %v397 = vsub.f32 %v319, %v361
    %v398 = vsub.f32 %v320, %v342
    %v399 = vsub.f32 %v321, %v361
    %v400 = vsub.f32 %v322, %v342
    %v401 = vsub.f32 %v323, %v361
    %v402 = vmul.f32 %v362, 1.442695
    %v403 = vpow.pop %v402
    %v404 = vmul.f32 %v363, 1.442695
    %v405 = vpow.pop %v404
    %v406 = vmul.f32 %v364, 1.442695
    %v407 = vpow.pop %v406
    %v408 = vmul.f32 %v365, 1.442695
    %v409 = vpow.pop %v408
    %v410 = vmul.f32 %v366, 1.442695
    %v411 = vpow.pop %v410
    %v412 = vmul.f32 %v367, 1.442695
    %v413 = vpow.pop %v412
    %v414 = vmul.f32 %v368, 1.442695
    %v415 = vpow.pop %v414
    %v416 = vmul.f32 %v369, 1.442695
    %v417 = vpow.pop %v416
    %v418 = vmul.f32 %v370, 1.442695
    %v419 = vpow.pop %v418
    %v420 = vmul.f32 %v371, 1.442695
    %v421 = vpow.pop %v420
    %v422 = vmul.f32 %v372, 1.442695
    %v423 = vpow.pop %v422
    %v424 = vmul.f32 %v373, 1.442695
    %v425 = vpow.pop %v424
    %v426 = vmul.f32 %v374, 1.442695
    %v427 = vpow.pop %v426
    %v428 = vmul.f32 %v375, 1.442695
    %v429 = vpow.pop %v428
    %v430 = vmul.f32 %v376, 1.442695
    %v431 = vpow.pop %v430
    %v432 = vmul.f32 %v377, 1.442695
    %v433 = vpow.pop %v432
    %v434 = vmul.f32 %v378, 1.442695
    %v435 = vpow.pop %v434
    %v436 = vmul.f32 %v379, 1.442695
    %v437 = vpow.pop %v436
    %v438 = vmul.f32 %v380, 1.442695
    %v439 = vpow.pop %v438
    %v440 = vmul.f32 %v381, 1.442695
    %v441 = vpow.pop %v440
    %v442 = vmul.f32 %v382, 1.442695
    %v443 = vpow.pop %v442
    %v444 = vmul.f32 %v383, 1.442695
    %v445 = vpow.pop %v444
    %v446 = vmul.f32 %v384, 1.442695
    %v447 = vpow.pop %v446
    %v448 = vmul.f32 %v385, 1.442695
    %v449 = vpow.pop %v448
    %v450 = vmul.f32 %v386, 1.442695
    %v451 = vpow.pop %v450
    %v452 = vmul.f32 %v387, 1.442695
    %v453 = vpow.pop %v452
    %v454 = vmul.f32 %v388, 1.442695
    %v455 = vpow.pop %v454
    %v456 = vmul.f32 %v389, 1.442695
    %v457 = vpow.pop %v456
    %v458 = vmul.f32 %v390, 1.442695
    %v459 = vpow.pop %v458
    %v460 = vmul.f32 %v391, 1.442695
    %v461 = vpow.pop %v460
    %v462 = vmul.f32 %v392, 1.442695
    %v463 = vpow.pop %v462
    %v464 = vmul.f32 %v393, 1.442695
    %v465 = vpow.pop %v464
    %v466 = vmul.f32 %v394, 1.442695
    %v467 = vpow.pop %v466
    %v468 = vmul.f32 %v395, 1.442695
    %v469 = vpow.pop %v468
    %v470 = vmul.f32 %v396, 1.442695
    %v471 = vpow.pop %v470
    %v472 = vmul.f32 %v397, 1.442695
    %v473 = vpow.pop %v472
    %v474 = vmul.f32 %v398, 1.442695
    %v475 = vpow.pop %v474
    %v476 = vmul.f32 %v399, 1.442695
    %v477 = vpow.pop %v476
    %v478 = vmul.f32 %v400, 1.442695
    %v479 = vpow.pop %v478
    %v480 = vmul.f32 %v401, 1.442695
    %v481 = vpow.pop %v480
    %v482 = vadd.f32 %v403, %v407
    %v483 = vadd.f32 %v482, %v411
    %v484 = vadd.f32 %v483, %v415
    %v485 = vadd.f32 %v484, %v419
    %v486 = vadd.f32 %v485, %v423
    %v487 = vadd.f32 %v486, %v427
    %v488 = vadd.f32 %v487, %v431
    %v489 = vadd.f32 %v488, %v435
    %v490 = vadd.f32 %v489, %v439
    %v491 = vadd.f32 %v490, %v443
    %v492 = vadd.f32 %v491, %v447
    %v493 = vadd.f32 %v492, %v451
    %v494 = vadd.f32 %v493, %v455
    %v495 = vadd.f32 %v494, %v459
    %v496 = vadd.f32 %v495, %v463
    %v497 = vadd.f32 %v496, %v467
    %v498 = vadd.f32 %v497, %v471
    %v499 = vadd.f32 %v498, %v475
    %v500 = vadd.f32 %v499, %v479
    %v501 = vadd.f32 %v405, %v409
    %v502 = vadd.f32 %v501, %v413
    %v503 = vadd.f32 %v502, %v417
    %v504 = vadd.f32 %v503, %v421
    %v505 = vadd.f32 %v504, %v425
    %v506 = vadd.f32 %v505, %v429
    %v507 = vadd.f32 %v506, %v433
    %v508 = vadd.f32 %v507, %v437
    %v509 = vadd.f32 %v508, %v441
    %v510 = vadd.f32 %v509, %v445
    %v511 = vadd.f32 %v510, %v449
    %v512 = vadd.f32 %v511, %v453
    %v513 = vadd.f32 %v512, %v457
    %v514 = vadd.f32 %v513, %v461
    %v515 = vadd.f32 %v514, %v465
    %v516 = vadd.f32 %v515, %v469
    %v517 = vadd.f32 %v516, %v473
    %v518 = vadd.f32 %v517, %v477
    %v519 = vadd.f32 %v518, %v481
    %v520 = vlog2.pop %v500
    %v521 = vmul.f32 %v520, 0.6931472
    %v522 = vlog2.pop %v519
    %v523 = vmul.f32 %v522, 0.6931472
    %v524 = vadd.f32 %v342, %v521
    %v525 = vadd.f32 %v361, %v523
    %v526 = vcvt.f32.s32.to.zero.pseudo %v70
    %v527 = vcvt.f32.s32.to.zero.pseudo %v71
    %vm528 = vcmp.eq.s32.totalorder %v526, 0
    %vm529 = vcmp.eq.s32.totalorder %v527, 0
    %vm530 = vcmp.eq.s32.totalorder %v526, 1
    %vm531 = vcmp.eq.s32.totalorder %v527, 1
    %vm532 = vcmp.eq.s32.totalorder %v526, 2
    %vm533 = vcmp.eq.s32.totalorder %v527, 2
    %vm534 = vcmp.eq.s32.totalorder %v526, 3
    %vm535 = vcmp.eq.s32.totalorder %v527, 3
    %vm536 = vcmp.eq.s32.totalorder %v526, 4
    %vm537 = vcmp.eq.s32.totalorder %v527, 4
    %vm538 = vcmp.eq.s32.totalorder %v526, 5
    %vm539 = vcmp.eq.s32.totalorder %v527, 5
    %vm540 = vcmp.eq.s32.totalorder %v526, 6
    %vm541 = vcmp.eq.s32.totalorder %v527, 6
    %vm542 = vcmp.eq.s32.totalorder %v526, 7
    %vm543 = vcmp.eq.s32.totalorder %v527, 7
    %vm544 = vcmp.eq.s32.totalorder %v526, 8
    %vm545 = vcmp.eq.s32.totalorder %v527, 8
    %vm546 = vcmp.eq.s32.totalorder %v526, 9
    %vm547 = vcmp.eq.s32.totalorder %v527, 9
    %vm548 = vcmp.eq.s32.totalorder %v526, 10
    %vm549 = vcmp.eq.s32.totalorder %v527, 10
    %vm550 = vcmp.eq.s32.totalorder %v526, 11
    %vm551 = vcmp.eq.s32.totalorder %v527, 11
    %vm552 = vcmp.eq.s32.totalorder %v526, 12
    %vm553 = vcmp.eq.s32.totalorder %v527, 12
    %vm554 = vcmp.eq.s32.totalorder %v526, 13
    %vm555 = vcmp.eq.s32.totalorder %v527, 13
    %vm556 = vcmp.eq.s32.totalorder %v526, 14
    %vm557 = vcmp.eq.s32.totalorder %v527, 14
    %vm558 = vcmp.eq.s32.totalorder %v526, 15
    %vm559 = vcmp.eq.s32.totalorder %v527, 15
    %vm560 = vcmp.eq.s32.totalorder %v526, 16
    %vm561 = vcmp.eq.s32.totalorder %v527, 16
    %vm562 = vcmp.eq.s32.totalorder %v526, 17
    %vm563 = vcmp.eq.s32.totalorder %v527, 17
    %vm564 = vcmp.eq.s32.totalorder %v526, 18
    %vm565 = vcmp.eq.s32.totalorder %v527, 18
    %vm566 = vcmp.eq.s32.totalorder %v526, 19
    %vm567 = vcmp.eq.s32.totalorder %v527, 19
    %v568 = vsel %vm528, %v284, 0.0
    %v569 = vsel %vm529, %v285, 0.0
    %v570 = vsel %vm530, %v286, 0.0
    %v571 = vsel %vm531, %v287, 0.0
    %v572 = vsel %vm532, %v288, 0.0
    %v573 = vsel %vm533, %v289, 0.0
    %v574 = vsel %vm534, %v290, 0.0
    %v575 = vsel %vm535, %v291, 0.0
    %v576 = vsel %vm536, %v292, 0.0
    %v577 = vsel %vm537, %v293, 0.0
    %v578 = vsel %vm538, %v294, 0.0
    %v579 = vsel %vm539, %v295, 0.0
    %v580 = vsel %vm540, %v296, 0.0
    %v581 = vsel %vm541, %v297, 0.0
    %v582 = vsel %vm542, %v298, 0.0
    %v583 = vsel %vm543, %v299, 0.0
    %v584 = vsel %vm544, %v300, 0.0
    %v585 = vsel %vm545, %v301, 0.0
    %v586 = vsel %vm546, %v302, 0.0
    %v587 = vsel %vm547, %v303, 0.0
    %v588 = vsel %vm548, %v304, 0.0
    %v589 = vsel %vm549, %v305, 0.0
    %v590 = vsel %vm550, %v306, 0.0
    %v591 = vsel %vm551, %v307, 0.0
    %v592 = vsel %vm552, %v308, 0.0
    %v593 = vsel %vm553, %v309, 0.0
    %v594 = vsel %vm554, %v310, 0.0
    %v595 = vsel %vm555, %v311, 0.0
    %v596 = vsel %vm556, %v312, 0.0
    %v597 = vsel %vm557, %v313, 0.0
    %v598 = vsel %vm558, %v314, 0.0
    %v599 = vsel %vm559, %v315, 0.0
    %v600 = vsel %vm560, %v316, 0.0
    %v601 = vsel %vm561, %v317, 0.0
    %v602 = vsel %vm562, %v318, 0.0
    %v603 = vsel %vm563, %v319, 0.0
    %v604 = vsel %vm564, %v320, 0.0
    %v605 = vsel %vm565, %v321, 0.0
    %v606 = vsel %vm566, %v322, 0.0
    %v607 = vsel %vm567, %v323, 0.0
    %v608 = vadd.f32 %v568, %v570
    %v609 = vadd.f32 %v608, %v572
    %v610 = vadd.f32 %v609, %v574
    %v611 = vadd.f32 %v610, %v576
    %v612 = vadd.f32 %v611, %v578
    %v613 = vadd.f32 %v612, %v580
    %v614 = vadd.f32 %v613, %v582
    %v615 = vadd.f32 %v614, %v584
    %v616 = vadd.f32 %v615, %v586
    %v617 = vadd.f32 %v616, %v588
    %v618 = vadd.f32 %v617, %v590
    %v619 = vadd.f32 %v618, %v592
    %v620 = vadd.f32 %v619, %v594
    %v621 = vadd.f32 %v620, %v596
    %v622 = vadd.f32 %v621, %v598
    %v623 = vadd.f32 %v622, %v600
    %v624 = vadd.f32 %v623, %v602
    %v625 = vadd.f32 %v624, %v604
    %v626 = vadd.f32 %v625, %v606
    %v627 = vadd.f32 %v569, %v571
    %v628 = vadd.f32 %v627, %v573
    %v629 = vadd.f32 %v628, %v575
    %v630 = vadd.f32 %v629, %v577
    %v631 = vadd.f32 %v630, %v579
    %v632 = vadd.f32 %v631, %v581
    %v633 = vadd.f32 %v632, %v583
    %v634 = vadd.f32 %v633, %v585
    %v635 = vadd.f32 %v634, %v587
    %v636 = vadd.f32 %v635, %v589
    %v637 = vadd.f32 %v636, %v591
    %v638 = vadd.f32 %v637, %v593
    %v639 = vadd.f32 %v638, %v595
    %v640 = vadd.f32 %v639, %v597
    %v641 = vadd.f32 %v640, %v599
    %v642 = vadd.f32 %v641, %v601
    %v643 = vadd.f32 %v642, %v603
    %v644 = vadd.f32 %v643, %v605
    %v645 = vadd.f32 %v644, %v607
    %v646 = vsub.f32 %v524, %v626
    %v647 = vsub.f32 %v525, %v645
    %v648 = vmul.f32 %v178, 5.0
    %v649 = vmul.f32 %v179, 5.0
    %v650 = vmul.f32 %v74, %v242
    %v651 = vmul.f32 %v75, %v243
    %v652 = vadd.f32 %v648, %v650
    %v653 = vadd.f32 %v649, %v651
    %v654 = vadd.f32 %v652, %v653
    %v655 = vrot.slane %v654, 4
    %v656 = vadd.f32 %v654, %v655
    %v657 = vrot.slane %v656, 2
    %v658 = vadd.f32 %v656, %v657
    %v659 = vrot.slane %v658, 1
    %v660 = vadd.f32 %v658, %v659
    %v661 = vmul.f32 %v78, %v108
    %v662 = vmul.f32 %v79, %v109
    %v663 = vadd.f32 %v661, %v662
    %v664 = vrot.slane %v663, 4
    %v665 = vadd.f32 %v663, %v664
    %v666 = vrot.slane %v665, 2
    %v667 = vadd.f32 %v665, %v666
    %v668 = vrot.slane %v667, 1
    %v669 = vadd.f32 %v667, %v668
    %v670 = vadd.f32 %v78, %v79
    %v671 = vrot.slane %v670, 4
    %v672 = vadd.f32 %v670, %v671
    %v673 = vrot.slane %v672, 2
    %v674 = vadd.f32 %v672, %v673
    %v675 = vrot.slane %v674, 1
    %v676 = vadd.f32 %v674, %v675
    %v677 = vmul.f32 %v74, %v646
    %v678 = vmul.f32 %v75, %v647
    %v679 = vadd.f32 %v677, %v678
    %v680 = vrot.slane %v679, 4
    %v681 = vadd.f32 %v679, %v680
    %v682 = vrot.slane %v681, 2
    %v683 = vadd.f32 %v681, %v682
    %v684 = vrot.slane %v683, 1
    %v685 = vadd.f32 %v683, %v684
    %v686 = vadd.f32 %v74, %v75
    %v687 = vrot.slane %v686, 4
    %v688 = vadd.f32 %v686, %v687
    %v689 = vrot.slane %v688, 2
    %v690 = vadd.f32 %v688, %v689
    %v691 = vrot.slane %v690, 1
    %v692 = vadd.f32 %v690, %v691
    %vm693 = vcmask 1040384
    %v694 = vsel %vm693, %v660, %v669
    %vm695 = vcmask 1041408
    %v696 = vsel %vm695, %v694, %v676
    %vm697 = vcmask 1042432
    %v698 = vsel %vm697, %v696, %v685
    %vm699 = vcmask 1043456
    %v700 = vsel %vm699, %v698, %v692
    %vm701 = vcmask 1044480
    %v702 = vsel %vm701, %v700, 0.0
    %703 = vst [vmem:[#allocation7] sm:$0xff] %v702
    // Predicated region
    $region18: #{tpu_custom_call.1} parent=1 // pred_check
      _
    $region19: #{tpu_custom_call.1} parent=1 // pred_check_branch
      %705 = sbr.rel (0) target = $region21
    $region20: #{tpu_custom_call.1} parent=1 // pred_region
      %s707 = ssub.s32 128, 128
      %708 = vsyncadd [#allocation4], %s707
      %s710 = sshll.u32 [#allocation7], 4
      %s711 = int_to_ptr.vmem [resolvable:$true] %s710
      %713 = dma.vmem_to_hbm [thread:$0]  %s711, 128, %s2, [#allocation4]
    $region21: #{tpu_custom_call.1} parent=1 // pred_fallthru
      _
    // Predicated region
    $region22: #{tpu_custom_call.1} parent=1 // pred_check
      _
    $region23: #{tpu_custom_call.1} parent=1 // pred_check_branch
      %715 = sbr.rel (0) target = $region25
    $region24: #{tpu_custom_call.1} parent=1 // pred_region
      %716 = dma.done [#allocation4], 128
    $region25: #{tpu_custom_call.1} parent=1 // pred_fallthru
      _
    %717 = vsyncpa [#allocation3], 1
    %718 = vsyncpa [#allocation6], 1
    %719 = vsyncpa [#allocation4], 1

</llo_original>
